<compile_context>
chip_gen: v7x
topology: tpu7x:2x2x1
jax: 0.10.0
libtpu: 0.0.40
codegen_flags: <defaults>
</compile_context>

<pallas_src>
import jax
import jax.numpy as jnp
from jax.experimental import pallas as pl
from jax.experimental.pallas import tpu as pltpu


# ----------------------------------------------------------------------------
# helpers
# ----------------------------------------------------------------------------
def _round_up(x, m):
    return ((x + m - 1) // m) * m


def _vmem_capacity_bytes():
    """Physical VMEM of the local TPU, conservative (v7x) fallback."""
    try:
        info = pltpu.get_tpu_info()
        cap = getattr(info, "vmem_capacity_bytes", None)
        if cap:
            return int(cap)
    except Exception:
        pass
    return 64 << 20  # v7x per-TensorCore VMEM (smallest across v5e/v6e/v7x)


def _choose_lane_tile(smp, b, ci, co, w_bytes, vmem_cap):
    """Pick the lane tile TM (multiple of 128, exact divisor of smp) subject to
    (a) vreg-resident accumulators and (b) a chip-aware VMEM budget that counts
    pipeline blocks + in-kernel temporaries."""
    # (a) keep the two (Co, TM) f32 accumulators ~vreg-resident.
    acc_cap = max(128, (16384 // co) // 128 * 128)

    # (b) per-lane VMEM bytes: double-buffered u/w/out blocks + temporaries
    #     (hoisted f32 weight upcast, accumulators / weight slices).
    per_lane = 2 * (2 * b * ci * 4 + 2 * ci * co * w_bytes + 2 * b * co * 4)
    per_lane += 2 * ci * co * 4 + 4 * co * 4
    budget = int(vmem_cap * (0.5 if vmem_cap >= (100 << 20) else 0.35))
    vmem_tm = max(128, (budget // per_lane) // 128 * 128)

    cap = min(acc_cap, vmem_tm, smp)

    # Largest 128-multiple divisor of smp that fits the cap (tiles divide exactly,
    # so weights can be padded once at pack time and never repadded per call).
    k = smp // 128
    best = 128
    d = 1
    while d * d <= k:
        if k % d == 0:
            for q in (d, k // d):
                tm = q * 128
                if best < tm <= cap:
                    best = tm
        d += 1
    return best


# ----------------------------------------------------------------------------
# Weight packing — call ONCE, reuse across forward calls.
# ----------------------------------------------------------------------------
def pack_spectral_weights(weights, *, weight_dtype=jnp.bfloat16):
    """weights: complex64 (4, Ci, Co, m1, m2, m3)  (the module's weights1..4 stacked)
    returns:  (2, Ci*Co, SMp) real/imag packed, corner-folded, lane-padded array.
    Caching this output removes a full weight-tensor HBM round trip per call."""
    S, Ci, Co, m1, m2, m3 = weights.shape
    M = m1 * m2 * m3
    SM = S * M
    SMp = _round_up(SM, 128)

    w_ri = jnp.stack([jnp.real(weights), jnp.imag(weights)], axis=0)   # (2,S,Ci,Co,...)
    w_ri = w_ri.reshape(2, S, Ci, Co, M)
    w_ri = jnp.transpose(w_ri, (0, 2, 3, 1, 4))                        # (2,Ci,Co,S,M)
    w_ri = w_ri.reshape(2, Ci * Co, SM).astype(weight_dtype)           # sublane = i*Co+o
    if SMp != SM:
        w_ri = jnp.pad(w_ri, ((0, 0), (0, 0), (0, SMp - SM)))
    return w_ri


# ----------------------------------------------------------------------------
# Pallas kernel.  Per grid step (one mode tile, ALL batches):
#   u_ref : (2, B, Ci, TM)     real/imag of u_ft corner-folded modes (f32)
#   w_ref : (2, Ci*Co, TM)     real/imag of weights (bf16 or f32), sublane = i*Co+o
#   o_ref : (2, B, Co, TM)     real/imag of output (f32)
# out[b, o, m] = sum_i u[b, i, m] * w[i*Co+o, m]   (complex, elementwise in m)
# ----------------------------------------------------------------------------
def _compl_mul_kernel(u_ref, w_ref, o_ref):
    _, B, Ci, TM = u_ref.shape
    CiCo = w_ref.shape[1]
    Co = CiCo // Ci

    # Hoisted weight upcast: once per mode tile, shared by every batch b
    # (the previous version re-did this for each b).
    wr = w_ref[0].astype(jnp.float32)          # (Ci*Co, TM)
    wi = w_ref[1].astype(jnp.float32)

    for b in range(B):
        acc_r = jnp.zeros((Co, TM), jnp.float32)
        acc_i = jnp.zeros((Co, TM), jnp.float32)

        if Ci <= 16:
            # Static unroll; all slices are sublane-tile aligned static slices.
            for i in range(Ci):
                ur = u_ref[0, b, i:i + 1, :]            # (1, TM), broadcast over Co
                ui = u_ref[1, b, i:i + 1, :]
                wri = wr[i * Co:(i + 1) * Co, :]        # (Co, TM)
                wii = wi[i * Co:(i + 1) * Co, :]
                acc_r = acc_r + (ur * wri - ui * wii)
                acc_i = acc_i + (ur * wii + ui * wri)
        else:
            # Bounded unroll for realistic FNO widths (Ci = 32..64): keeps MLIR
            # size and vreg live ranges in check.
            def body(i, carry):
                a_r, a_i = carry
                ur = u_ref[0, b, pl.ds(i, 1), :]
                ui = u_ref[1, b, pl.ds(i, 1), :]
                off = i * Co
                wri = jax.lax.dynamic_slice_in_dim(wr, off, Co, axis=0)
                wii = jax.lax.dynamic_slice_in_dim(wi, off, Co, axis=0)
                a_r = a_r + (ur * wri - ui * wii)
                a_i = a_i + (ur * wii + ui * wri)
                return a_r, a_i

            acc_r, acc_i = jax.lax.fori_loop(0, Ci, body, (acc_r, acc_i), unroll=4)

        o_ref[0, b] = acc_r
        o_ref[1, b] = acc_i


def compl_mul3d_pallas(u_slices, w_packed):
    """u_slices: complex64 (4, B, Ci, m1, m2, m3)
       w_packed: (2, Ci*Co, SMp) from pack_spectral_weights (bf16 or f32)
       returns : complex64 (4, B, Co, m1, m2, m3)"""
    S, B, Ci, m1, m2, m3 = u_slices.shape
    M = m1 * m2 * m3
    SM = S * M
    SMp = _round_up(SM, 128)

    CiCo = w_packed.shape[1]
    if CiCo % Ci != 0:
        raise ValueError(f"packed weight channel axis {CiCo} not divisible by Ci={Ci}")
    Co = CiCo // Ci
    if w_packed.shape != (2, CiCo, SMp):
        raise ValueError(f"packed weights have shape {w_packed.shape}, "
                         f"expected {(2, CiCo, SMp)} for these modes")

    w_bytes = jnp.dtype(w_packed.dtype).itemsize
    vmem_cap = _vmem_capacity_bytes()
    TM = _choose_lane_tile(SMp, B, Ci, Co, w_bytes, vmem_cap)

    # ---- per-call activation packing (weights are pre-packed & cached) -----
    # lane index = s * M + m (corner-major), matching the weight layout.
    u_ri = jnp.stack([jnp.real(u_slices), jnp.imag(u_slices)], axis=0)
    u_ri = u_ri.reshape(2, S, B, Ci, M)
    u_ri = jnp.transpose(u_ri, (0, 2, 3, 1, 4)).reshape(2, B, Ci, SM)
    u_ri = u_ri.astype(jnp.float32)
    if SMp != SM:
        u_ri = jnp.pad(u_ri, ((0, 0), (0, 0), (0, 0), (0, SMp - SM)))

    # Grid: mode tiles only.  B lives inside the block, so weight reuse across
    # batch is structural (independent of grid sharding) and megacore splits
    # the mode axis (1x total weight HBM traffic on v7x).
    grid = (SMp // TM,)

    u_spec = pl.BlockSpec((2, B, Ci, TM), lambda m: (0, 0, 0, m))
    w_spec = pl.BlockSpec((2, CiCo, TM), lambda m: (0, 0, m))
    o_spec = pl.BlockSpec((2, B, Co, TM), lambda m: (0, 0, 0, m))

    # VMEM limit: double-buffered pipeline blocks + in-kernel temporaries
    # (hoisted f32 weights, accumulators), with headroom; clamped to 90% of
    # the physical capacity of the local chip generation.
    block_bytes = 2 * B * Ci * TM * 4 + 2 * CiCo * TM * w_bytes + 2 * B * Co * TM * 4
    temp_bytes = 2 * CiCo * TM * 4 + 4 * Co * TM * 4
    vmem_limit = int(2 * block_bytes * 1.15 + temp_bytes * 1.25) + (2 << 20)
    vmem_limit = max(16 << 20, min(vmem_limit, int(vmem_cap * 0.9)))

    out_ri = pl.pallas_call(
        _compl_mul_kernel,
        out_shape=jax.ShapeDtypeStruct((2, B, Co, SMp), jnp.float32),
        grid_spec=pltpu.PrefetchScalarGridSpec(
            num_scalar_prefetch=0,
            grid=grid,
            in_specs=[u_spec, w_spec],
            out_specs=o_spec,
        ),
        compiler_params=pltpu.CompilerParams(
            dimension_semantics=("parallel",),
            vmem_limit_bytes=vmem_limit,
        ),
    )(u_ri, w_packed)

    # ---- unfold: lanes -> (S, M), rebuild complex corner slices ------------
    out_ri = out_ri[..., :SM].reshape(2, B, Co, S, M)
    out = out_ri[0] + 1j * out_ri[1]                    # (B, Co, S, M)
    out = jnp.transpose(out, (2, 0, 1, 3))              # (S, B, Co, M)
    return out.reshape(S, B, Co, m1, m2, m3).astype(jnp.complex64)


# ----------------------------------------------------------------------------
# SpectralConv3d forward (default path: x_in=None, x_out=None)
# ----------------------------------------------------------------------------
def _corner_slices(u_ft, m1, m2, m3):
    return jnp.stack([
        u_ft[:, :, :m1, :m2, :m3],
        u_ft[:, :, -m1:, :m2, :m3],
        u_ft[:, :, :m1, -m2:, :m3],
        u_ft[:, :, -m1:, -m2:, :m3],
    ], axis=0)


def _assemble_out_ft(factors, B, Co, s1, s2, s3, m1, m2, m3):
    out_ft = jnp.zeros((B, Co, s1, s2, s3 // 2 + 1), dtype=jnp.complex64)
    out_ft = out_ft.at[:, :, :m1, :m2, :m3].set(factors[0])
    out_ft = out_ft.at[:, :, -m1:, :m2, :m3].set(factors[1])
    out_ft = out_ft.at[:, :, :m1, -m2:, :m3].set(factors[2])
    out_ft = out_ft.at[:, :, -m1:, -m2:, :m3].set(factors[3])
    return out_ft


def spectral_conv3d_forward(u, w_packed, modes1, modes2, modes3):
    """u: float32 (B, Ci, s1, s2, s3); w_packed: output of pack_spectral_weights
    (pack ONCE and reuse — it is the dominant DMA stream of the kernel)."""
    B, Ci = u.shape[0], u.shape[1]
    s1, s2, s3 = u.shape[-3], u.shape[-2], u.shape[-1]
    Co = w_packed.shape[1] // Ci

    # Mode-shape assumptions of the original module, now checked explicitly.
    if not (2 * modes1 <= s1 and 2 * modes2 <= s2 and modes3 <= s3 // 2 + 1):
        raise ValueError(
            f"modes ({modes1},{modes2},{modes3}) incompatible with grid "
            f"({s1},{s2},{s3}): need 2*m1<=s1, 2*m2<=s2, m3<=s3//2+1")

    # TODO(synk): rfftn/irfftn stay as jnp.fft host-level XLA ops (no Pallas FFT).
    u_ft = jnp.fft.rfftn(u, axes=(-3, -2, -1)).astype(jnp.complex64)
    u_slices = _corner_slices(u_ft, modes1, modes2, modes3)

    factors = compl_mul3d_pallas(u_slices, w_packed)

    # Keep the zeros+scatter inside the same jit as the kernel so XLA fuses it.
    out_ft = _assemble_out_ft(factors, B, Co, s1, s2, s3, modes1, modes2, modes3)
    u_out = jnp.fft.irfftn(out_ft, s=(s1, s2, s3), axes=(-3, -2, -1))
    return u_out.astype(jnp.float32)


def init_weights(key, in_channels, out_channels, m1, m2, m3):
    """Mimics: scale * torch.rand(Ci, Co, m1, m2, m3, dtype=cfloat) x4 (stacked)."""
    scale = 1.0 / (in_channels * out_channels)
    shape = (4, in_channels, out_channels, m1, m2, m3)
    kr, ki = jax.random.split(key)
    wr = scale * jax.random.uniform(kr, shape, dtype=jnp.float32)
    wi = scale * jax.random.uniform(ki, shape, dtype=jnp.float32)
    return (wr + 1j * wi).astype(jnp.complex64)


if __name__ == "__main__":
    B, Ci, Co = 2, 8, 8
    s1 = s2 = s3 = 16
    modes1 = modes2 = modes3 = 4

    key = jax.random.PRNGKey(0)
    k_u, k_w = jax.random.split(key)
    u = jax.random.normal(k_u, (B, Ci, s1, s2, s3), dtype=jnp.float32)
    weights = init_weights(k_w, Ci, Co, modes1, modes2, modes3)

    # ---- check 1: f32-packed weights vs exact complex einsum ---------------
    u_ft = jnp.fft.rfftn(u, axes=(-3, -2, -1)).astype(jnp.complex64)
    u_slices = _corner_slices(u_ft, modes1, modes2, modes3)
    w_f32 = pack_spectral_weights(weights, weight_dtype=jnp.float32)
    factors_kernel = jax.block_until_ready(compl_mul3d_pallas(u_slices, w_f32))
    factors_ref = jnp.einsum('sbixyz,sioxyz->sboxyz', u_slices, weights,
                             precision=jax.lax.Precision.HIGHEST)
    err = float(jnp.max(jnp.abs(factors_kernel - factors_ref)))
    assert err < 1e-4, f"f32 factor mismatch: {err}"

    # ---- check 2: end-to-end forward with cached bf16-packed weights -------
    w_bf16 = pack_spectral_weights(weights, weight_dtype=jnp.bfloat16)  # pack ONCE
    fwd = jax.jit(lambda uu, wp: spectral_conv3d_forward(
        uu, wp, modes1, modes2, modes3))
    out = jax.block_until_ready(fwd(u, w_bf16))
    assert out.shape == (B, Co, s1, s2, s3)

    # reference forward with the SAME bf16 quantization of the weights
    w_q = (jnp.real(weights).astype(jnp.bfloat16).astype(jnp.float32)
           + 1j * jnp.imag(weights).astype(jnp.bfloat16).astype(jnp.float32)
           ).astype(jnp.complex64)
    factors_q = jnp.einsum('sbixyz,sioxyz->sboxyz', u_slices, w_q,
                           precision=jax.lax.Precision.HIGHEST)
    out_ft_ref = _assemble_out_ft(factors_q, B, Co, s1, s2, s3,
                                  modes1, modes2, modes3)
    out_ref = jnp.fft.irfftn(out_ft_ref, s=(s1, s2, s3),
                             axes=(-3, -2, -1)).astype(jnp.float32)
    err2 = float(jnp.max(jnp.abs(out - out_ref)))
    assert err2 < 1e-3, f"forward mismatch: {err2}"

    print("KERNEL_OK")
</pallas_src>

<mosaic_0001>
module attributes {stable_mosaic.version = 11 : i64} {
  func.func @_compl_mul_kernel(%arg0: i32, %arg1: memref<2x2x8x256xf32, #tpu.memory_space<vmem>>, %arg2: memref<2x64x256xf32, #tpu.memory_space<vmem>>, %arg3: memref<2x2x8x256xf32, #tpu.memory_space<vmem>>) attributes {dimension_semantics = [#tpu.dimension_semantics<parallel>], iteration_bounds = array<i64: 1>, scalar_prefetch = 0 : i64, scratch_operands = 0 : i64, tpu.core_type = #tpu.core_type<tc>, window_params = [{transform_indices = @transform_0, window_bounds = array<i64: 2, 2, 8, 256>}, {transform_indices = @transform_1, window_bounds = array<i64: 2, 64, 256>}, {transform_indices = @transform_2, window_bounds = array<i64: 2, 2, 8, 256>}]} {
    %c0 = arith.constant 0 : index
    %c0_0 = arith.constant 0 : index
    %c0_1 = arith.constant 0 : index
    %0 = vector.load %arg2[%c0, %c0_0, %c0_1] : memref<2x64x256xf32, #tpu.memory_space<vmem>>, vector<1x64x256xf32>
    %1 = vector.shape_cast %0 : vector<1x64x256xf32> to vector<64x256xf32>
    %c1 = arith.constant 1 : index
    %c0_2 = arith.constant 0 : index
    %c0_3 = arith.constant 0 : index
    %2 = vector.load %arg2[%c1, %c0_2, %c0_3] : memref<2x64x256xf32, #tpu.memory_space<vmem>>, vector<1x64x256xf32>
    %3 = vector.shape_cast %2 : vector<1x64x256xf32> to vector<64x256xf32>
    %cst = arith.constant 0.000000e+00 : f32
    %4 = vector.broadcast %cst : f32 to vector<8x256xf32>
    %cst_4 = arith.constant 0.000000e+00 : f32
    %5 = vector.broadcast %cst_4 : f32 to vector<8x256xf32>
    %c0_5 = arith.constant 0 : index
    %c0_6 = arith.constant 0 : index
    %c0_7 = arith.constant 0 : index
    %c0_8 = arith.constant 0 : index
    %6 = vector.load %arg1[%c0_5, %c0_6, %c0_7, %c0_8] : memref<2x2x8x256xf32, #tpu.memory_space<vmem>>, vector<1x1x1x256xf32>
    %7 = vector.shape_cast %6 : vector<1x1x1x256xf32> to vector<1x256xf32>
    %c1_9 = arith.constant 1 : index
    %c0_10 = arith.constant 0 : index
    %c0_11 = arith.constant 0 : index
    %c0_12 = arith.constant 0 : index
    %8 = vector.load %arg1[%c1_9, %c0_10, %c0_11, %c0_12] : memref<2x2x8x256xf32, #tpu.memory_space<vmem>>, vector<1x1x1x256xf32>
    %9 = vector.shape_cast %8 : vector<1x1x1x256xf32> to vector<1x256xf32>
    %10 = vector.extract_strided_slice %1 {offsets = [0, 0], sizes = [8, 256], strides = [1, 1]} : vector<64x256xf32> to vector<8x256xf32>
    %11 = vector.extract_strided_slice %3 {offsets = [0, 0], sizes = [8, 256], strides = [1, 1]} : vector<64x256xf32> to vector<8x256xf32>
    %12 = vector.broadcast %7 : vector<1x256xf32> to vector<8x256xf32>
    %13 = arith.mulf %12, %10 : vector<8x256xf32>
    %14 = vector.broadcast %9 : vector<1x256xf32> to vector<8x256xf32>
    %15 = arith.mulf %14, %11 : vector<8x256xf32>
    %16 = arith.subf %13, %15 : vector<8x256xf32>
    %17 = arith.addf %4, %16 : vector<8x256xf32>
    %18 = vector.broadcast %7 : vector<1x256xf32> to vector<8x256xf32>
    %19 = arith.mulf %18, %11 : vector<8x256xf32>
    %20 = vector.broadcast %9 : vector<1x256xf32> to vector<8x256xf32>
    %21 = arith.mulf %20, %10 : vector<8x256xf32>
    %22 = arith.addf %19, %21 : vector<8x256xf32>
    %23 = arith.addf %5, %22 : vector<8x256xf32>
    %c0_13 = arith.constant 0 : index
    %c0_14 = arith.constant 0 : index
    %c1_15 = arith.constant 1 : index
    %c0_16 = arith.constant 0 : index
    %24 = vector.load %arg1[%c0_13, %c0_14, %c1_15, %c0_16] : memref<2x2x8x256xf32, #tpu.memory_space<vmem>>, vector<1x1x1x256xf32>
    %25 = vector.shape_cast %24 : vector<1x1x1x256xf32> to vector<1x256xf32>
    %c1_17 = arith.constant 1 : index
    %c0_18 = arith.constant 0 : index
    %c1_19 = arith.constant 1 : index
    %c0_20 = arith.constant 0 : index
    %26 = vector.load %arg1[%c1_17, %c0_18, %c1_19, %c0_20] : memref<2x2x8x256xf32, #tpu.memory_space<vmem>>, vector<1x1x1x256xf32>
    %27 = vector.shape_cast %26 : vector<1x1x1x256xf32> to vector<1x256xf32>
    %28 = vector.extract_strided_slice %1 {offsets = [8, 0], sizes = [8, 256], strides = [1, 1]} : vector<64x256xf32> to vector<8x256xf32>
    %29 = vector.extract_strided_slice %3 {offsets = [8, 0], sizes = [8, 256], strides = [1, 1]} : vector<64x256xf32> to vector<8x256xf32>
    %30 = vector.broadcast %25 : vector<1x256xf32> to vector<8x256xf32>
    %31 = arith.mulf %30, %28 : vector<8x256xf32>
    %32 = vector.broadcast %27 : vector<1x256xf32> to vector<8x256xf32>
    %33 = arith.mulf %32, %29 : vector<8x256xf32>
    %34 = arith.subf %31, %33 : vector<8x256xf32>
    %35 = arith.addf %17, %34 : vector<8x256xf32>
    %36 = vector.broadcast %25 : vector<1x256xf32> to vector<8x256xf32>
    %37 = arith.mulf %36, %29 : vector<8x256xf32>
    %38 = vector.broadcast %27 : vector<1x256xf32> to vector<8x256xf32>
    %39 = arith.mulf %38, %28 : vector<8x256xf32>
    %40 = arith.addf %37, %39 : vector<8x256xf32>
    %41 = arith.addf %23, %40 : vector<8x256xf32>
    %c0_21 = arith.constant 0 : index
    %c0_22 = arith.constant 0 : index
    %c2 = arith.constant 2 : index
    %c0_23 = arith.constant 0 : index
    %42 = vector.load %arg1[%c0_21, %c0_22, %c2, %c0_23] : memref<2x2x8x256xf32, #tpu.memory_space<vmem>>, vector<1x1x1x256xf32>
    %43 = vector.shape_cast %42 : vector<1x1x1x256xf32> to vector<1x256xf32>
    %c1_24 = arith.constant 1 : index
    %c0_25 = arith.constant 0 : index
    %c2_26 = arith.constant 2 : index
    %c0_27 = arith.constant 0 : index
    %44 = vector.load %arg1[%c1_24, %c0_25, %c2_26, %c0_27] : memref<2x2x8x256xf32, #tpu.memory_space<vmem>>, vector<1x1x1x256xf32>
    %45 = vector.shape_cast %44 : vector<1x1x1x256xf32> to vector<1x256xf32>
    %46 = vector.extract_strided_slice %1 {offsets = [16, 0], sizes = [8, 256], strides = [1, 1]} : vector<64x256xf32> to vector<8x256xf32>
    %47 = vector.extract_strided_slice %3 {offsets = [16, 0], sizes = [8, 256], strides = [1, 1]} : vector<64x256xf32> to vector<8x256xf32>
    %48 = vector.broadcast %43 : vector<1x256xf32> to vector<8x256xf32>
    %49 = arith.mulf %48, %46 : vector<8x256xf32>
    %50 = vector.broadcast %45 : vector<1x256xf32> to vector<8x256xf32>
    %51 = arith.mulf %50, %47 : vector<8x256xf32>
    %52 = arith.subf %49, %51 : vector<8x256xf32>
    %53 = arith.addf %35, %52 : vector<8x256xf32>
    %54 = vector.broadcast %43 : vector<1x256xf32> to vector<8x256xf32>
    %55 = arith.mulf %54, %47 : vector<8x256xf32>
    %56 = vector.broadcast %45 : vector<1x256xf32> to vector<8x256xf32>
    %57 = arith.mulf %56, %46 : vector<8x256xf32>
    %58 = arith.addf %55, %57 : vector<8x256xf32>
    %59 = arith.addf %41, %58 : vector<8x256xf32>
    %c0_28 = arith.constant 0 : index
    %c0_29 = arith.constant 0 : index
    %c3 = arith.constant 3 : index
    %c0_30 = arith.constant 0 : index
    %60 = vector.load %arg1[%c0_28, %c0_29, %c3, %c0_30] : memref<2x2x8x256xf32, #tpu.memory_space<vmem>>, vector<1x1x1x256xf32>
    %61 = vector.shape_cast %60 : vector<1x1x1x256xf32> to vector<1x256xf32>
    %c1_31 = arith.constant 1 : index
    %c0_32 = arith.constant 0 : index
    %c3_33 = arith.constant 3 : index
    %c0_34 = arith.constant 0 : index
    %62 = vector.load %arg1[%c1_31, %c0_32, %c3_33, %c0_34] : memref<2x2x8x256xf32, #tpu.memory_space<vmem>>, vector<1x1x1x256xf32>
    %63 = vector.shape_cast %62 : vector<1x1x1x256xf32> to vector<1x256xf32>
    %64 = vector.extract_strided_slice %1 {offsets = [24, 0], sizes = [8, 256], strides = [1, 1]} : vector<64x256xf32> to vector<8x256xf32>
    %65 = vector.extract_strided_slice %3 {offsets = [24, 0], sizes = [8, 256], strides = [1, 1]} : vector<64x256xf32> to vector<8x256xf32>
    %66 = vector.broadcast %61 : vector<1x256xf32> to vector<8x256xf32>
    %67 = arith.mulf %66, %64 : vector<8x256xf32>
    %68 = vector.broadcast %63 : vector<1x256xf32> to vector<8x256xf32>
    %69 = arith.mulf %68, %65 : vector<8x256xf32>
    %70 = arith.subf %67, %69 : vector<8x256xf32>
    %71 = arith.addf %53, %70 : vector<8x256xf32>
    %72 = vector.broadcast %61 : vector<1x256xf32> to vector<8x256xf32>
    %73 = arith.mulf %72, %65 : vector<8x256xf32>
    %74 = vector.broadcast %63 : vector<1x256xf32> to vector<8x256xf32>
    %75 = arith.mulf %74, %64 : vector<8x256xf32>
    %76 = arith.addf %73, %75 : vector<8x256xf32>
    %77 = arith.addf %59, %76 : vector<8x256xf32>
    %c0_35 = arith.constant 0 : index
    %c0_36 = arith.constant 0 : index
    %c4 = arith.constant 4 : index
    %c0_37 = arith.constant 0 : index
    %78 = vector.load %arg1[%c0_35, %c0_36, %c4, %c0_37] : memref<2x2x8x256xf32, #tpu.memory_space<vmem>>, vector<1x1x1x256xf32>
    %79 = vector.shape_cast %78 : vector<1x1x1x256xf32> to vector<1x256xf32>
    %c1_38 = arith.constant 1 : index
    %c0_39 = arith.constant 0 : index
    %c4_40 = arith.constant 4 : index
    %c0_41 = arith.constant 0 : index
    %80 = vector.load %arg1[%c1_38, %c0_39, %c4_40, %c0_41] : memref<2x2x8x256xf32, #tpu.memory_space<vmem>>, vector<1x1x1x256xf32>
    %81 = vector.shape_cast %80 : vector<1x1x1x256xf32> to vector<1x256xf32>
    %82 = vector.extract_strided_slice %1 {offsets = [32, 0], sizes = [8, 256], strides = [1, 1]} : vector<64x256xf32> to vector<8x256xf32>
    %83 = vector.extract_strided_slice %3 {offsets = [32, 0], sizes = [8, 256], strides = [1, 1]} : vector<64x256xf32> to vector<8x256xf32>
    %84 = vector.broadcast %79 : vector<1x256xf32> to vector<8x256xf32>
    %85 = arith.mulf %84, %82 : vector<8x256xf32>
    %86 = vector.broadcast %81 : vector<1x256xf32> to vector<8x256xf32>
    %87 = arith.mulf %86, %83 : vector<8x256xf32>
    %88 = arith.subf %85, %87 : vector<8x256xf32>
    %89 = arith.addf %71, %88 : vector<8x256xf32>
    %90 = vector.broadcast %79 : vector<1x256xf32> to vector<8x256xf32>
    %91 = arith.mulf %90, %83 : vector<8x256xf32>
    %92 = vector.broadcast %81 : vector<1x256xf32> to vector<8x256xf32>
    %93 = arith.mulf %92, %82 : vector<8x256xf32>
    %94 = arith.addf %91, %93 : vector<8x256xf32>
    %95 = arith.addf %77, %94 : vector<8x256xf32>
    %c0_42 = arith.constant 0 : index
    %c0_43 = arith.constant 0 : index
    %c5 = arith.constant 5 : index
    %c0_44 = arith.constant 0 : index
    %96 = vector.load %arg1[%c0_42, %c0_43, %c5, %c0_44] : memref<2x2x8x256xf32, #tpu.memory_space<vmem>>, vector<1x1x1x256xf32>
    %97 = vector.shape_cast %96 : vector<1x1x1x256xf32> to vector<1x256xf32>
    %c1_45 = arith.constant 1 : index
    %c0_46 = arith.constant 0 : index
    %c5_47 = arith.constant 5 : index
    %c0_48 = arith.constant 0 : index
    %98 = vector.load %arg1[%c1_45, %c0_46, %c5_47, %c0_48] : memref<2x2x8x256xf32, #tpu.memory_space<vmem>>, vector<1x1x1x256xf32>
    %99 = vector.shape_cast %98 : vector<1x1x1x256xf32> to vector<1x256xf32>
    %100 = vector.extract_strided_slice %1 {offsets = [40, 0], sizes = [8, 256], strides = [1, 1]} : vector<64x256xf32> to vector<8x256xf32>
    %101 = vector.extract_strided_slice %3 {offsets = [40, 0], sizes = [8, 256], strides = [1, 1]} : vector<64x256xf32> to vector<8x256xf32>
    %102 = vector.broadcast %97 : vector<1x256xf32> to vector<8x256xf32>
    %103 = arith.mulf %102, %100 : vector<8x256xf32>
    %104 = vector.broadcast %99 : vector<1x256xf32> to vector<8x256xf32>
    %105 = arith.mulf %104, %101 : vector<8x256xf32>
    %106 = arith.subf %103, %105 : vector<8x256xf32>
    %107 = arith.addf %89, %106 : vector<8x256xf32>
    %108 = vector.broadcast %97 : vector<1x256xf32> to vector<8x256xf32>
    %109 = arith.mulf %108, %101 : vector<8x256xf32>
    %110 = vector.broadcast %99 : vector<1x256xf32> to vector<8x256xf32>
    %111 = arith.mulf %110, %100 : vector<8x256xf32>
    %112 = arith.addf %109, %111 : vector<8x256xf32>
    %113 = arith.addf %95, %112 : vector<8x256xf32>
    %c0_49 = arith.constant 0 : index
    %c0_50 = arith.constant 0 : index
    %c6 = arith.constant 6 : index
    %c0_51 = arith.constant 0 : index
    %114 = vector.load %arg1[%c0_49, %c0_50, %c6, %c0_51] : memref<2x2x8x256xf32, #tpu.memory_space<vmem>>, vector<1x1x1x256xf32>
    %115 = vector.shape_cast %114 : vector<1x1x1x256xf32> to vector<1x256xf32>
    %c1_52 = arith.constant 1 : index
    %c0_53 = arith.constant 0 : index
    %c6_54 = arith.constant 6 : index
    %c0_55 = arith.constant 0 : index
    %116 = vector.load %arg1[%c1_52, %c0_53, %c6_54, %c0_55] : memref<2x2x8x256xf32, #tpu.memory_space<vmem>>, vector<1x1x1x256xf32>
    %117 = vector.shape_cast %116 : vector<1x1x1x256xf32> to vector<1x256xf32>
    %118 = vector.extract_strided_slice %1 {offsets = [48, 0], sizes = [8, 256], strides = [1, 1]} : vector<64x256xf32> to vector<8x256xf32>
    %119 = vector.extract_strided_slice %3 {offsets = [48, 0], sizes = [8, 256], strides = [1, 1]} : vector<64x256xf32> to vector<8x256xf32>
    %120 = vector.broadcast %115 : vector<1x256xf32> to vector<8x256xf32>
    %121 = arith.mulf %120, %118 : vector<8x256xf32>
    %122 = vector.broadcast %117 : vector<1x256xf32> to vector<8x256xf32>
    %123 = arith.mulf %122, %119 : vector<8x256xf32>
    %124 = arith.subf %121, %123 : vector<8x256xf32>
    %125 = arith.addf %107, %124 : vector<8x256xf32>
    %126 = vector.broadcast %115 : vector<1x256xf32> to vector<8x256xf32>
    %127 = arith.mulf %126, %119 : vector<8x256xf32>
    %128 = vector.broadcast %117 : vector<1x256xf32> to vector<8x256xf32>
    %129 = arith.mulf %128, %118 : vector<8x256xf32>
    %130 = arith.addf %127, %129 : vector<8x256xf32>
    %131 = arith.addf %113, %130 : vector<8x256xf32>
    %c0_56 = arith.constant 0 : index
    %c0_57 = arith.constant 0 : index
    %c7 = arith.constant 7 : index
    %c0_58 = arith.constant 0 : index
    %132 = vector.load %arg1[%c0_56, %c0_57, %c7, %c0_58] : memref<2x2x8x256xf32, #tpu.memory_space<vmem>>, vector<1x1x1x256xf32>
    %133 = vector.shape_cast %132 : vector<1x1x1x256xf32> to vector<1x256xf32>
    %c1_59 = arith.constant 1 : index
    %c0_60 = arith.constant 0 : index
    %c7_61 = arith.constant 7 : index
    %c0_62 = arith.constant 0 : index
    %134 = vector.load %arg1[%c1_59, %c0_60, %c7_61, %c0_62] : memref<2x2x8x256xf32, #tpu.memory_space<vmem>>, vector<1x1x1x256xf32>
    %135 = vector.shape_cast %134 : vector<1x1x1x256xf32> to vector<1x256xf32>
    %136 = vector.extract_strided_slice %1 {offsets = [56, 0], sizes = [8, 256], strides = [1, 1]} : vector<64x256xf32> to vector<8x256xf32>
    %137 = vector.extract_strided_slice %3 {offsets = [56, 0], sizes = [8, 256], strides = [1, 1]} : vector<64x256xf32> to vector<8x256xf32>
    %138 = vector.broadcast %133 : vector<1x256xf32> to vector<8x256xf32>
    %139 = arith.mulf %138, %136 : vector<8x256xf32>
    %140 = vector.broadcast %135 : vector<1x256xf32> to vector<8x256xf32>
    %141 = arith.mulf %140, %137 : vector<8x256xf32>
    %142 = arith.subf %139, %141 : vector<8x256xf32>
    %143 = arith.addf %125, %142 : vector<8x256xf32>
    %144 = vector.broadcast %133 : vector<1x256xf32> to vector<8x256xf32>
    %145 = arith.mulf %144, %137 : vector<8x256xf32>
    %146 = vector.broadcast %135 : vector<1x256xf32> to vector<8x256xf32>
    %147 = arith.mulf %146, %136 : vector<8x256xf32>
    %148 = arith.addf %145, %147 : vector<8x256xf32>
    %149 = arith.addf %131, %148 : vector<8x256xf32>
    %c0_63 = arith.constant 0 : index
    %c0_64 = arith.constant 0 : index
    %c0_65 = arith.constant 0 : index
    %c0_66 = arith.constant 0 : index
    %150 = vector.load %arg3[%c0_63, %c0_64, %c0_65, %c0_66] : memref<2x2x8x256xf32, #tpu.memory_space<vmem>>, vector<1x1x8x256xf32>
    %151 = vector.shape_cast %150 : vector<1x1x8x256xf32> to vector<8x256xf32>
    %152 = vector.shape_cast %143 : vector<8x256xf32> to vector<1x1x8x256xf32>
    tpu.vector_store %arg3[%c0_63, %c0_64, %c0_65, %c0_66], %152 {strides = array<i32>} : memref<2x2x8x256xf32, #tpu.memory_space<vmem>>, vector<1x1x8x256xf32>,
    %c1_67 = arith.constant 1 : index
    %c0_68 = arith.constant 0 : index
    %c0_69 = arith.constant 0 : index
    %c0_70 = arith.constant 0 : index
    %153 = vector.load %arg3[%c1_67, %c0_68, %c0_69, %c0_70] : memref<2x2x8x256xf32, #tpu.memory_space<vmem>>, vector<1x1x8x256xf32>
    %154 = vector.shape_cast %153 : vector<1x1x8x256xf32> to vector<8x256xf32>
    %155 = vector.shape_cast %149 : vector<8x256xf32> to vector<1x1x8x256xf32>
    tpu.vector_store %arg3[%c1_67, %c0_68, %c0_69, %c0_70], %155 {strides = array<i32>} : memref<2x2x8x256xf32, #tpu.memory_space<vmem>>, vector<1x1x8x256xf32>,
    %cst_71 = arith.constant 0.000000e+00 : f32
    %156 = vector.broadcast %cst_71 : f32 to vector<8x256xf32>
    %cst_72 = arith.constant 0.000000e+00 : f32
    %157 = vector.broadcast %cst_72 : f32 to vector<8x256xf32>
    %c0_73 = arith.constant 0 : index
    %c1_74 = arith.constant 1 : index
    %c0_75 = arith.constant 0 : index
    %c0_76 = arith.constant 0 : index
    %158 = vector.load %arg1[%c0_73, %c1_74, %c0_75, %c0_76] : memref<2x2x8x256xf32, #tpu.memory_space<vmem>>, vector<1x1x1x256xf32>
    %159 = vector.shape_cast %158 : vector<1x1x1x256xf32> to vector<1x256xf32>
    %c1_77 = arith.constant 1 : index
    %c1_78 = arith.constant 1 : index
    %c0_79 = arith.constant 0 : index
    %c0_80 = arith.constant 0 : index
    %160 = vector.load %arg1[%c1_77, %c1_78, %c0_79, %c0_80] : memref<2x2x8x256xf32, #tpu.memory_space<vmem>>, vector<1x1x1x256xf32>
    %161 = vector.shape_cast %160 : vector<1x1x1x256xf32> to vector<1x256xf32>
    %162 = vector.extract_strided_slice %1 {offsets = [0, 0], sizes = [8, 256], strides = [1, 1]} : vector<64x256xf32> to vector<8x256xf32>
    %163 = vector.extract_strided_slice %3 {offsets = [0, 0], sizes = [8, 256], strides = [1, 1]} : vector<64x256xf32> to vector<8x256xf32>
    %164 = vector.broadcast %159 : vector<1x256xf32> to vector<8x256xf32>
    %165 = arith.mulf %164, %162 : vector<8x256xf32>
    %166 = vector.broadcast %161 : vector<1x256xf32> to vector<8x256xf32>
    %167 = arith.mulf %166, %163 : vector<8x256xf32>
    %168 = arith.subf %165, %167 : vector<8x256xf32>
    %169 = arith.addf %156, %168 : vector<8x256xf32>
    %170 = vector.broadcast %159 : vector<1x256xf32> to vector<8x256xf32>
    %171 = arith.mulf %170, %163 : vector<8x256xf32>
    %172 = vector.broadcast %161 : vector<1x256xf32> to vector<8x256xf32>
    %173 = arith.mulf %172, %162 : vector<8x256xf32>
    %174 = arith.addf %171, %173 : vector<8x256xf32>
    %175 = arith.addf %157, %174 : vector<8x256xf32>
    %c0_81 = arith.constant 0 : index
    %c1_82 = arith.constant 1 : index
    %c1_83 = arith.constant 1 : index
    %c0_84 = arith.constant 0 : index
    %176 = vector.load %arg1[%c0_81, %c1_82, %c1_83, %c0_84] : memref<2x2x8x256xf32, #tpu.memory_space<vmem>>, vector<1x1x1x256xf32>
    %177 = vector.shape_cast %176 : vector<1x1x1x256xf32> to vector<1x256xf32>
    %c1_85 = arith.constant 1 : index
    %c1_86 = arith.constant 1 : index
    %c1_87 = arith.constant 1 : index
    %c0_88 = arith.constant 0 : index
    %178 = vector.load %arg1[%c1_85, %c1_86, %c1_87, %c0_88] : memref<2x2x8x256xf32, #tpu.memory_space<vmem>>, vector<1x1x1x256xf32>
    %179 = vector.shape_cast %178 : vector<1x1x1x256xf32> to vector<1x256xf32>
    %180 = vector.extract_strided_slice %1 {offsets = [8, 0], sizes = [8, 256], strides = [1, 1]} : vector<64x256xf32> to vector<8x256xf32>
    %181 = vector.extract_strided_slice %3 {offsets = [8, 0], sizes = [8, 256], strides = [1, 1]} : vector<64x256xf32> to vector<8x256xf32>
    %182 = vector.broadcast %177 : vector<1x256xf32> to vector<8x256xf32>
    %183 = arith.mulf %182, %180 : vector<8x256xf32>
    %184 = vector.broadcast %179 : vector<1x256xf32> to vector<8x256xf32>
    %185 = arith.mulf %184, %181 : vector<8x256xf32>
    %186 = arith.subf %183, %185 : vector<8x256xf32>
    %187 = arith.addf %169, %186 : vector<8x256xf32>
    %188 = vector.broadcast %177 : vector<1x256xf32> to vector<8x256xf32>
    %189 = arith.mulf %188, %181 : vector<8x256xf32>
    %190 = vector.broadcast %179 : vector<1x256xf32> to vector<8x256xf32>
    %191 = arith.mulf %190, %180 : vector<8x256xf32>
    %192 = arith.addf %189, %191 : vector<8x256xf32>
    %193 = arith.addf %175, %192 : vector<8x256xf32>
    %c0_89 = arith.constant 0 : index
    %c1_90 = arith.constant 1 : index
    %c2_91 = arith.constant 2 : index
    %c0_92 = arith.constant 0 : index
    %194 = vector.load %arg1[%c0_89, %c1_90, %c2_91, %c0_92] : memref<2x2x8x256xf32, #tpu.memory_space<vmem>>, vector<1x1x1x256xf32>
    %195 = vector.shape_cast %194 : vector<1x1x1x256xf32> to vector<1x256xf32>
    %c1_93 = arith.constant 1 : index
    %c1_94 = arith.constant 1 : index
    %c2_95 = arith.constant 2 : index
    %c0_96 = arith.constant 0 : index
    %196 = vector.load %arg1[%c1_93, %c1_94, %c2_95, %c0_96] : memref<2x2x8x256xf32, #tpu.memory_space<vmem>>, vector<1x1x1x256xf32>
    %197 = vector.shape_cast %196 : vector<1x1x1x256xf32> to vector<1x256xf32>
    %198 = vector.extract_strided_slice %1 {offsets = [16, 0], sizes = [8, 256], strides = [1, 1]} : vector<64x256xf32> to vector<8x256xf32>
    %199 = vector.extract_strided_slice %3 {offsets = [16, 0], sizes = [8, 256], strides = [1, 1]} : vector<64x256xf32> to vector<8x256xf32>
    %200 = vector.broadcast %195 : vector<1x256xf32> to vector<8x256xf32>
    %201 = arith.mulf %200, %198 : vector<8x256xf32>
    %202 = vector.broadcast %197 : vector<1x256xf32> to vector<8x256xf32>
    %203 = arith.mulf %202, %199 : vector<8x256xf32>
    %204 = arith.subf %201, %203 : vector<8x256xf32>
    %205 = arith.addf %187, %204 : vector<8x256xf32>
    %206 = vector.broadcast %195 : vector<1x256xf32> to vector<8x256xf32>
    %207 = arith.mulf %206, %199 : vector<8x256xf32>
    %208 = vector.broadcast %197 : vector<1x256xf32> to vector<8x256xf32>
    %209 = arith.mulf %208, %198 : vector<8x256xf32>
    %210 = arith.addf %207, %209 : vector<8x256xf32>
    %211 = arith.addf %193, %210 : vector<8x256xf32>
    %c0_97 = arith.constant 0 : index
    %c1_98 = arith.constant 1 : index
    %c3_99 = arith.constant 3 : index
    %c0_100 = arith.constant 0 : index
    %212 = vector.load %arg1[%c0_97, %c1_98, %c3_99, %c0_100] : memref<2x2x8x256xf32, #tpu.memory_space<vmem>>, vector<1x1x1x256xf32>
    %213 = vector.shape_cast %212 : vector<1x1x1x256xf32> to vector<1x256xf32>
    %c1_101 = arith.constant 1 : index
    %c1_102 = arith.constant 1 : index
    %c3_103 = arith.constant 3 : index
    %c0_104 = arith.constant 0 : index
    %214 = vector.load %arg1[%c1_101, %c1_102, %c3_103, %c0_104] : memref<2x2x8x256xf32, #tpu.memory_space<vmem>>, vector<1x1x1x256xf32>
    %215 = vector.shape_cast %214 : vector<1x1x1x256xf32> to vector<1x256xf32>
    %216 = vector.extract_strided_slice %1 {offsets = [24, 0], sizes = [8, 256], strides = [1, 1]} : vector<64x256xf32> to vector<8x256xf32>
    %217 = vector.extract_strided_slice %3 {offsets = [24, 0], sizes = [8, 256], strides = [1, 1]} : vector<64x256xf32> to vector<8x256xf32>
    %218 = vector.broadcast %213 : vector<1x256xf32> to vector<8x256xf32>
    %219 = arith.mulf %218, %216 : vector<8x256xf32>
    %220 = vector.broadcast %215 : vector<1x256xf32> to vector<8x256xf32>
    %221 = arith.mulf %220, %217 : vector<8x256xf32>
    %222 = arith.subf %219, %221 : vector<8x256xf32>
    %223 = arith.addf %205, %222 : vector<8x256xf32>
    %224 = vector.broadcast %213 : vector<1x256xf32> to vector<8x256xf32>
    %225 = arith.mulf %224, %217 : vector<8x256xf32>
    %226 = vector.broadcast %215 : vector<1x256xf32> to vector<8x256xf32>
    %227 = arith.mulf %226, %216 : vector<8x256xf32>
    %228 = arith.addf %225, %227 : vector<8x256xf32>
    %229 = arith.addf %211, %228 : vector<8x256xf32>
    %c0_105 = arith.constant 0 : index
    %c1_106 = arith.constant 1 : index
    %c4_107 = arith.constant 4 : index
    %c0_108 = arith.constant 0 : index
    %230 = vector.load %arg1[%c0_105, %c1_106, %c4_107, %c0_108] : memref<2x2x8x256xf32, #tpu.memory_space<vmem>>, vector<1x1x1x256xf32>
    %231 = vector.shape_cast %230 : vector<1x1x1x256xf32> to vector<1x256xf32>
    %c1_109 = arith.constant 1 : index
    %c1_110 = arith.constant 1 : index
    %c4_111 = arith.constant 4 : index
    %c0_112 = arith.constant 0 : index
    %232 = vector.load %arg1[%c1_109, %c1_110, %c4_111, %c0_112] : memref<2x2x8x256xf32, #tpu.memory_space<vmem>>, vector<1x1x1x256xf32>
    %233 = vector.shape_cast %232 : vector<1x1x1x256xf32> to vector<1x256xf32>
    %234 = vector.extract_strided_slice %1 {offsets = [32, 0], sizes = [8, 256], strides = [1, 1]} : vector<64x256xf32> to vector<8x256xf32>
    %235 = vector.extract_strided_slice %3 {offsets = [32, 0], sizes = [8, 256], strides = [1, 1]} : vector<64x256xf32> to vector<8x256xf32>
    %236 = vector.broadcast %231 : vector<1x256xf32> to vector<8x256xf32>
    %237 = arith.mulf %236, %234 : vector<8x256xf32>
    %238 = vector.broadcast %233 : vector<1x256xf32> to vector<8x256xf32>
    %239 = arith.mulf %238, %235 : vector<8x256xf32>
    %240 = arith.subf %237, %239 : vector<8x256xf32>
    %241 = arith.addf %223, %240 : vector<8x256xf32>
    %242 = vector.broadcast %231 : vector<1x256xf32> to vector<8x256xf32>
    %243 = arith.mulf %242, %235 : vector<8x256xf32>
    %244 = vector.broadcast %233 : vector<1x256xf32> to vector<8x256xf32>
    %245 = arith.mulf %244, %234 : vector<8x256xf32>
    %246 = arith.addf %243, %245 : vector<8x256xf32>
    %247 = arith.addf %229, %246 : vector<8x256xf32>
    %c0_113 = arith.constant 0 : index
    %c1_114 = arith.constant 1 : index
    %c5_115 = arith.constant 5 : index
    %c0_116 = arith.constant 0 : index
    %248 = vector.load %arg1[%c0_113, %c1_114, %c5_115, %c0_116] : memref<2x2x8x256xf32, #tpu.memory_space<vmem>>, vector<1x1x1x256xf32>
    %249 = vector.shape_cast %248 : vector<1x1x1x256xf32> to vector<1x256xf32>
    %c1_117 = arith.constant 1 : index
    %c1_118 = arith.constant 1 : index
    %c5_119 = arith.constant 5 : index
    %c0_120 = arith.constant 0 : index
    %250 = vector.load %arg1[%c1_117, %c1_118, %c5_119, %c0_120] : memref<2x2x8x256xf32, #tpu.memory_space<vmem>>, vector<1x1x1x256xf32>
    %251 = vector.shape_cast %250 : vector<1x1x1x256xf32> to vector<1x256xf32>
    %252 = vector.extract_strided_slice %1 {offsets = [40, 0], sizes = [8, 256], strides = [1, 1]} : vector<64x256xf32> to vector<8x256xf32>
    %253 = vector.extract_strided_slice %3 {offsets = [40, 0], sizes = [8, 256], strides = [1, 1]} : vector<64x256xf32> to vector<8x256xf32>
    %254 = vector.broadcast %249 : vector<1x256xf32> to vector<8x256xf32>
    %255 = arith.mulf %254, %252 : vector<8x256xf32>
    %256 = vector.broadcast %251 : vector<1x256xf32> to vector<8x256xf32>
    %257 = arith.mulf %256, %253 : vector<8x256xf32>
    %258 = arith.subf %255, %257 : vector<8x256xf32>
    %259 = arith.addf %241, %258 : vector<8x256xf32>
    %260 = vector.broadcast %249 : vector<1x256xf32> to vector<8x256xf32>
    %261 = arith.mulf %260, %253 : vector<8x256xf32>
    %262 = vector.broadcast %251 : vector<1x256xf32> to vector<8x256xf32>
    %263 = arith.mulf %262, %252 : vector<8x256xf32>
    %264 = arith.addf %261, %263 : vector<8x256xf32>
    %265 = arith.addf %247, %264 : vector<8x256xf32>
    %c0_121 = arith.constant 0 : index
    %c1_122 = arith.constant 1 : index
    %c6_123 = arith.constant 6 : index
    %c0_124 = arith.constant 0 : index
    %266 = vector.load %arg1[%c0_121, %c1_122, %c6_123, %c0_124] : memref<2x2x8x256xf32, #tpu.memory_space<vmem>>, vector<1x1x1x256xf32>
    %267 = vector.shape_cast %266 : vector<1x1x1x256xf32> to vector<1x256xf32>
    %c1_125 = arith.constant 1 : index
    %c1_126 = arith.constant 1 : index
    %c6_127 = arith.constant 6 : index
    %c0_128 = arith.constant 0 : index
    %268 = vector.load %arg1[%c1_125, %c1_126, %c6_127, %c0_128] : memref<2x2x8x256xf32, #tpu.memory_space<vmem>>, vector<1x1x1x256xf32>
    %269 = vector.shape_cast %268 : vector<1x1x1x256xf32> to vector<1x256xf32>
    %270 = vector.extract_strided_slice %1 {offsets = [48, 0], sizes = [8, 256], strides = [1, 1]} : vector<64x256xf32> to vector<8x256xf32>
    %271 = vector.extract_strided_slice %3 {offsets = [48, 0], sizes = [8, 256], strides = [1, 1]} : vector<64x256xf32> to vector<8x256xf32>
    %272 = vector.broadcast %267 : vector<1x256xf32> to vector<8x256xf32>
    %273 = arith.mulf %272, %270 : vector<8x256xf32>
    %274 = vector.broadcast %269 : vector<1x256xf32> to vector<8x256xf32>
    %275 = arith.mulf %274, %271 : vector<8x256xf32>
    %276 = arith.subf %273, %275 : vector<8x256xf32>
    %277 = arith.addf %259, %276 : vector<8x256xf32>
    %278 = vector.broadcast %267 : vector<1x256xf32> to vector<8x256xf32>
    %279 = arith.mulf %278, %271 : vector<8x256xf32>
    %280 = vector.broadcast %269 : vector<1x256xf32> to vector<8x256xf32>
    %281 = arith.mulf %280, %270 : vector<8x256xf32>
    %282 = arith.addf %279, %281 : vector<8x256xf32>
    %283 = arith.addf %265, %282 : vector<8x256xf32>
    %c0_129 = arith.constant 0 : index
    %c1_130 = arith.constant 1 : index
    %c7_131 = arith.constant 7 : index
    %c0_132 = arith.constant 0 : index
    %284 = vector.load %arg1[%c0_129, %c1_130, %c7_131, %c0_132] : memref<2x2x8x256xf32, #tpu.memory_space<vmem>>, vector<1x1x1x256xf32>
    %285 = vector.shape_cast %284 : vector<1x1x1x256xf32> to vector<1x256xf32>
    %c1_133 = arith.constant 1 : index
    %c1_134 = arith.constant 1 : index
    %c7_135 = arith.constant 7 : index
    %c0_136 = arith.constant 0 : index
    %286 = vector.load %arg1[%c1_133, %c1_134, %c7_135, %c0_136] : memref<2x2x8x256xf32, #tpu.memory_space<vmem>>, vector<1x1x1x256xf32>
    %287 = vector.shape_cast %286 : vector<1x1x1x256xf32> to vector<1x256xf32>
    %288 = vector.extract_strided_slice %1 {offsets = [56, 0], sizes = [8, 256], strides = [1, 1]} : vector<64x256xf32> to vector<8x256xf32>
    %289 = vector.extract_strided_slice %3 {offsets = [56, 0], sizes = [8, 256], strides = [1, 1]} : vector<64x256xf32> to vector<8x256xf32>
    %290 = vector.broadcast %285 : vector<1x256xf32> to vector<8x256xf32>
    %291 = arith.mulf %290, %288 : vector<8x256xf32>
    %292 = vector.broadcast %287 : vector<1x256xf32> to vector<8x256xf32>
    %293 = arith.mulf %292, %289 : vector<8x256xf32>
    %294 = arith.subf %291, %293 : vector<8x256xf32>
    %295 = arith.addf %277, %294 : vector<8x256xf32>
    %296 = vector.broadcast %285 : vector<1x256xf32> to vector<8x256xf32>
    %297 = arith.mulf %296, %289 : vector<8x256xf32>
    %298 = vector.broadcast %287 : vector<1x256xf32> to vector<8x256xf32>
    %299 = arith.mulf %298, %288 : vector<8x256xf32>
    %300 = arith.addf %297, %299 : vector<8x256xf32>
    %301 = arith.addf %283, %300 : vector<8x256xf32>
    %c0_137 = arith.constant 0 : index
    %c1_138 = arith.constant 1 : index
    %c0_139 = arith.constant 0 : index
    %c0_140 = arith.constant 0 : index
    %302 = vector.load %arg3[%c0_137, %c1_138, %c0_139, %c0_140] : memref<2x2x8x256xf32, #tpu.memory_space<vmem>>, vector<1x1x8x256xf32>
    %303 = vector.shape_cast %302 : vector<1x1x8x256xf32> to vector<8x256xf32>
    %304 = vector.shape_cast %295 : vector<8x256xf32> to vector<1x1x8x256xf32>
    tpu.vector_store %arg3[%c0_137, %c1_138, %c0_139, %c0_140], %304 {strides = array<i32>} : memref<2x2x8x256xf32, #tpu.memory_space<vmem>>, vector<1x1x8x256xf32>,
    %c1_141 = arith.constant 1 : index
    %c1_142 = arith.constant 1 : index
    %c0_143 = arith.constant 0 : index
    %c0_144 = arith.constant 0 : index
    %305 = vector.load %arg3[%c1_141, %c1_142, %c0_143, %c0_144] : memref<2x2x8x256xf32, #tpu.memory_space<vmem>>, vector<1x1x8x256xf32>
    %306 = vector.shape_cast %305 : vector<1x1x8x256xf32> to vector<8x256xf32>
    %307 = vector.shape_cast %301 : vector<8x256xf32> to vector<1x1x8x256xf32>
    tpu.vector_store %arg3[%c1_141, %c1_142, %c0_143, %c0_144], %307 {strides = array<i32>} : memref<2x2x8x256xf32, #tpu.memory_space<vmem>>, vector<1x1x8x256xf32>,
    return
  }
  func.func @transform_0(%arg0: i32) -> (i32, i32, i32, i32) {
    %c0_i32 = arith.constant 0 : i32
    %c0_i32_0 = arith.constant 0 : i32
    %c0_i32_1 = arith.constant 0 : i32
    %c0_i32_2 = arith.constant 0 : i32
    return %c0_i32, %c0_i32_0, %c0_i32_1, %arg0 : i32, i32, i32, i32
  }
  func.func @transform_1(%arg0: i32) -> (i32, i32, i32) {
    %c0_i32 = arith.constant 0 : i32
    %c0_i32_0 = arith.constant 0 : i32
    %c0_i32_1 = arith.constant 0 : i32
    return %c0_i32, %c0_i32_0, %arg0 : i32, i32, i32
  }
  func.func @transform_2(%arg0: i32) -> (i32, i32, i32, i32) {
    %c0_i32 = arith.constant 0 : i32
    %c0_i32_0 = arith.constant 0 : i32
    %c0_i32_1 = arith.constant 0 : i32
    %c0_i32_2 = arith.constant 0 : i32
    return %c0_i32, %c0_i32_0, %c0_i32_1, %arg0 : i32, i32, i32, i32
  }
}

</mosaic_0001>

<llo_original>
// kernel: tpu_custom_call.1
$region0: #{tpu_custom_call.1}
  #allocation0 [shape = 'u32[]', space=smem, size = 0x4, offset = 0x4, fixed_abs, tag = 'smem constant byte address 0x4 - core index']
  #allocation1 [shape = 'u32[144,128]{1,0:T(1,128)}', space=vmem, size = 0x12000, scoped, tag = 'internal scratch']
  %s0 = inlined_call_operand.hbm [shape: f32[2,2,8,256], index: 0, kind: input, shape index: {}]
  %s1 = inlined_call_operand.hbm [shape: f32[2,64,256], index: 1, kind: input, shape index: {}]
  %s2 = inlined_call_operand.hbm [shape: f32[2,2,8,256], index: 2, kind: output, shape index: {}]
  %s3 = sld [smem:[#allocation0]]
  $region26: #{tpu_custom_call.1} parent=0
    _
  %s5 = ssub.s32 1, %s3
  %s6 = scalar_select 0, %s5, %s3
  $region1: #{tpu_custom_call.1} parent=0
    #allocation2 [shape = 'u8[32768]{0}', space=vmem, size = 0x8000, scoped, tag = 'input window, operand 0, single buffered']
    #allocation3 [shape = 's32[1]{0}', space=sflag, size = 0x4, scoped, tag = 'scoped memory for tpu_custom_call.1']
    #allocation4 [shape = 's32[1]{0}', space=sflag, size = 0x4, scoped, tag = 'scoped memory for tpu_custom_call.1']
    #allocation5 [shape = 'u8[131072]{0}', space=vmem, size = 0x20000, scoped, tag = 'input window, operand 1, single buffered']
    #allocation6 [shape = 's32[1]{0}', space=sflag, size = 0x4, scoped, tag = 'scoped memory for tpu_custom_call.1']
    #allocation7 [shape = 'u8[32768]{0}', space=vmem, size = 0x8000, scoped, tag = 'output window, operand 0, single buffered']
    %7 = vsyncpa [#allocation3], 0
    %8 = vsyncpa [#allocation6], 0
    %9 = vsyncpa [#allocation4], 0
    // Predicated region
    $region2: #{tpu_custom_call.1} parent=1 // pred_check
      _
    $region3: #{tpu_custom_call.1} parent=1 // pred_check_branch
      %11 = sbr.rel (0) target = $region5
    $region4: #{tpu_custom_call.1} parent=1 // pred_region
      %s13 = ssub.s32 1024, 1024
      %14 = vsyncadd [#allocation3], %s13
      %s15 = sshll.u32 [#allocation2], 4
      %s16 = int_to_ptr.vmem [resolvable:$true] %s15
      %21 = dma.hbm_to_vmem [thread:$0]  %s0, 1024, %s16, [#allocation3], 256, 256, 16
    $region5: #{tpu_custom_call.1} parent=1 // pred_fallthru
      _
    // Predicated region
    $region6: #{tpu_custom_call.1} parent=1 // pred_check
      _
    $region7: #{tpu_custom_call.1} parent=1 // pred_check_branch
      %23 = sbr.rel (0) target = $region9
    $region8: #{tpu_custom_call.1} parent=1 // pred_region
      %s25 = ssub.s32 4096, 4096
      %26 = vsyncadd [#allocation6], %s25
      %s27 = sshll.u32 [#allocation5], 4
      %s28 = int_to_ptr.vmem [resolvable:$true] %s27
      %33 = dma.hbm_to_vmem [thread:$0]  %s1, 4096, %s28, [#allocation6], 256, 256, 16
    $region9: #{tpu_custom_call.1} parent=1 // pred_fallthru
      _
    // Predicated region
    $region10: #{tpu_custom_call.1} parent=1 // pred_check
      _
    $region11: #{tpu_custom_call.1} parent=1 // pred_check_branch
      %35 = sbr.rel (0) target = $region13
    $region12: #{tpu_custom_call.1} parent=1 // pred_region
      %36 = dma.done [#allocation3], 1024
    $region13: #{tpu_custom_call.1} parent=1 // pred_fallthru
      _
    // Predicated region
    $region14: #{tpu_custom_call.1} parent=1 // pred_check
      _
    $region15: #{tpu_custom_call.1} parent=1 // pred_check_branch
      %38 = sbr.rel (0) target = $region17
    $region16: #{tpu_custom_call.1} parent=1 // pred_region
      %39 = dma.done [#allocation6], 4096
    $region17: #{tpu_custom_call.1} parent=1 // pred_fallthru
      _
    %v40 = vld [vmem:[#allocation5] sm:$0xff]
    %v41 = vld [vmem:[#allocation5 + $0x8] sm:$0xff]
    %v42 = vld [vmem:[#allocation5 + $0x10] sm:$0xff]
    %v43 = vld [vmem:[#allocation5 + $0x18] sm:$0xff]
    %v44 = vld [vmem:[#allocation5 + $0x20] sm:$0xff]
    %v45 = vld [vmem:[#allocation5 + $0x28] sm:$0xff]
    %v46 = vld [vmem:[#allocation5 + $0x30] sm:$0xff]
    %v47 = vld [vmem:[#allocation5 + $0x38] sm:$0xff]
    %v48 = vld [vmem:[#allocation5 + $0x40] sm:$0xff]
    %v49 = vld [vmem:[#allocation5 + $0x48] sm:$0xff]
    %v50 = vld [vmem:[#allocation5 + $0x50] sm:$0xff]
    %v51 = vld [vmem:[#allocation5 + $0x58] sm:$0xff]
    %v52 = vld [vmem:[#allocation5 + $0x60] sm:$0xff]
    %v53 = vld [vmem:[#allocation5 + $0x68] sm:$0xff]
    %v54 = vld [vmem:[#allocation5 + $0x70] sm:$0xff]
    %v55 = vld [vmem:[#allocation5 + $0x78] sm:$0xff]
    %s56 = scalar_lea.vmem [#allocation5], 128
    %v57 = vld [vmem:[%s56] sm:$0xff]
    %v58 = vld [vmem:[%s56 + $0x8] sm:$0xff]
    %v59 = vld [vmem:[%s56 + $0x10] sm:$0xff]
    %v60 = vld [vmem:[%s56 + $0x18] sm:$0xff]
    %v61 = vld [vmem:[%s56 + $0x20] sm:$0xff]
    %v62 = vld [vmem:[%s56 + $0x28] sm:$0xff]
    %v63 = vld [vmem:[%s56 + $0x30] sm:$0xff]
    %v64 = vld [vmem:[%s56 + $0x38] sm:$0xff]
    %v65 = vld [vmem:[%s56 + $0x40] sm:$0xff]
    %v66 = vld [vmem:[%s56 + $0x48] sm:$0xff]
    %v67 = vld [vmem:[%s56 + $0x50] sm:$0xff]
    %v68 = vld [vmem:[%s56 + $0x58] sm:$0xff]
    %v69 = vld [vmem:[%s56 + $0x60] sm:$0xff]
    %v70 = vld [vmem:[%s56 + $0x68] sm:$0xff]
    %v71 = vld [vmem:[%s56 + $0x70] sm:$0xff]
    %v72 = vld [vmem:[%s56 + $0x78] sm:$0xff]
    %v73 = vld [vmem:[#allocation2] ss:$8 sm:$0x3]
    %s74 = scalar_lea.vmem [#allocation2], 32
    %v75 = vld [vmem:[%s74] ss:$8 sm:$0x3]
    %v77 = vlaneseq
    %v78 = vshrl.u32 %v77, 7
    %v79 = vsub.s32 0, %v78
    %v80 = vrot.slane %v73, %v79
    %v81 = vlaneseq
    %v82 = vshrl.u32 %v81, 7
    %v83 = vsub.s32 1, %v82
    %v84 = vrot.slane %v73, %v83
    %v87 = vmul.f32 %v80, %v40
    %v88 = vmul.f32 %v84, %v41
    %v90 = vlaneseq
    %v91 = vshrl.u32 %v90, 7
    %v92 = vsub.s32 0, %v91
    %v93 = vrot.slane %v75, %v92
    %v94 = vlaneseq
    %v95 = vshrl.u32 %v94, 7
    %v96 = vsub.s32 1, %v95
    %v97 = vrot.slane %v75, %v96
    %v100 = vmul.f32 %v93, %v57
    %v101 = vmul.f32 %v97, %v58
    %v102 = vsub.f32 %v87, %v100
    %v103 = vsub.f32 %v88, %v101
    %v104 = vadd.f32 %v102, 0.0
    %v105 = vadd.f32 %v103, 0.0
    %v106 = vmul.f32 %v80, %v57
    %v107 = vmul.f32 %v84, %v58
    %v108 = vmul.f32 %v93, %v40
    %v109 = vmul.f32 %v97, %v41
    %v110 = vadd.f32 %v106, %v108
    %v111 = vadd.f32 %v107, %v109
    %v112 = vadd.f32 %v110, 0.0
    %v113 = vadd.f32 %v111, 0.0
    %s114 = scalar_lea.vmem [#allocation2], 1
    %v115 = vld [vmem:[%s114] ss:$8 sm:$0x3]
    %s116 = scalar_lea.vmem %s74, 1 [#allocation2]
    %v117 = vld [vmem:[%s116] ss:$8 sm:$0x3]
    %v119 = vlaneseq
    %v120 = vshrl.u32 %v119, 7
    %v121 = vsub.s32 0, %v120
    %v122 = vrot.slane %v115, %v121
    %v123 = vlaneseq
    %v124 = vshrl.u32 %v123, 7
    %v125 = vsub.s32 1, %v124
    %v126 = vrot.slane %v115, %v125
    %v129 = vmul.f32 %v122, %v42
    %v130 = vmul.f32 %v126, %v43
    %v132 = vlaneseq
    %v133 = vshrl.u32 %v132, 7
    %v134 = vsub.s32 0, %v133
    %v135 = vrot.slane %v117, %v134
    %v136 = vlaneseq
    %v137 = vshrl.u32 %v136, 7
    %v138 = vsub.s32 1, %v137
    %v139 = vrot.slane %v117, %v138
    %v142 = vmul.f32 %v135, %v59
    %v143 = vmul.f32 %v139, %v60
    %v144 = vsub.f32 %v129, %v142
    %v145 = vsub.f32 %v130, %v143
    %v146 = vadd.f32 %v104, %v144
    %v147 = vadd.f32 %v105, %v145
    %v148 = vmul.f32 %v122, %v59
    %v149 = vmul.f32 %v126, %v60
    %v150 = vmul.f32 %v135, %v42
    %v151 = vmul.f32 %v139, %v43
    %v152 = vadd.f32 %v148, %v150
    %v153 = vadd.f32 %v149, %v151
    %v154 = vadd.f32 %v112, %v152
    %v155 = vadd.f32 %v113, %v153
    %s156 = scalar_lea.vmem [#allocation2], 2
    %v157 = vld [vmem:[%s156] ss:$8 sm:$0x3]
    %s158 = scalar_lea.vmem %s74, 2 [#allocation2]
    %v159 = vld [vmem:[%s158] ss:$8 sm:$0x3]
    %v161 = vlaneseq
    %v162 = vshrl.u32 %v161, 7
    %v163 = vsub.s32 0, %v162
    %v164 = vrot.slane %v157, %v163
    %v165 = vlaneseq
    %v166 = vshrl.u32 %v165, 7
    %v167 = vsub.s32 1, %v166
    %v168 = vrot.slane %v157, %v167
    %v171 = vmul.f32 %v164, %v44
    %v172 = vmul.f32 %v168, %v45
    %v174 = vlaneseq
    %v175 = vshrl.u32 %v174, 7
    %v176 = vsub.s32 0, %v175
    %v177 = vrot.slane %v159, %v176
    %v178 = vlaneseq
    %v179 = vshrl.u32 %v178, 7
    %v180 = vsub.s32 1, %v179
    %v181 = vrot.slane %v159, %v180
    %v184 = vmul.f32 %v177, %v61
    %v185 = vmul.f32 %v181, %v62
    %v186 = vsub.f32 %v171, %v184
    %v187 = vsub.f32 %v172, %v185
    %v188 = vadd.f32 %v146, %v186
    %v189 = vadd.f32 %v147, %v187
    %v190 = vmul.f32 %v164, %v61
    %v191 = vmul.f32 %v168, %v62
    %v192 = vmul.f32 %v177, %v44
    %v193 = vmul.f32 %v181, %v45
    %v194 = vadd.f32 %v190, %v192
    %v195 = vadd.f32 %v191, %v193
    %v196 = vadd.f32 %v154, %v194
    %v197 = vadd.f32 %v155, %v195
    %s198 = scalar_lea.vmem [#allocation2], 3
    %v199 = vld [vmem:[%s198] ss:$8 sm:$0x3]
    %s200 = scalar_lea.vmem %s74, 3 [#allocation2]
    %v201 = vld [vmem:[%s200] ss:$8 sm:$0x3]
    %v203 = vlaneseq
    %v204 = vshrl.u32 %v203, 7
    %v205 = vsub.s32 0, %v204
    %v206 = vrot.slane %v199, %v205
    %v207 = vlaneseq
    %v208 = vshrl.u32 %v207, 7
    %v209 = vsub.s32 1, %v208
    %v210 = vrot.slane %v199, %v209
    %v213 = vmul.f32 %v206, %v46
    %v214 = vmul.f32 %v210, %v47
    %v216 = vlaneseq
    %v217 = vshrl.u32 %v216, 7
    %v218 = vsub.s32 0, %v217
    %v219 = vrot.slane %v201, %v218
    %v220 = vlaneseq
    %v221 = vshrl.u32 %v220, 7
    %v222 = vsub.s32 1, %v221
    %v223 = vrot.slane %v201, %v222
    %v226 = vmul.f32 %v219, %v63
    %v227 = vmul.f32 %v223, %v64
    %v228 = vsub.f32 %v213, %v226
    %v229 = vsub.f32 %v214, %v227
    %v230 = vadd.f32 %v188, %v228
    %v231 = vadd.f32 %v189, %v229
    %v232 = vmul.f32 %v206, %v63
    %v233 = vmul.f32 %v210, %v64
    %v234 = vmul.f32 %v219, %v46
    %v235 = vmul.f32 %v223, %v47
    %v236 = vadd.f32 %v232, %v234
    %v237 = vadd.f32 %v233, %v235
    %v238 = vadd.f32 %v196, %v236
    %v239 = vadd.f32 %v197, %v237
    %s240 = scalar_lea.vmem [#allocation2], 4
    %v241 = vld [vmem:[%s240] ss:$8 sm:$0x3]
    %s242 = scalar_lea.vmem %s74, 4 [#allocation2]
    %v243 = vld [vmem:[%s242] ss:$8 sm:$0x3]
    %v245 = vlaneseq
    %v246 = vshrl.u32 %v245, 7
    %v247 = vsub.s32 0, %v246
    %v248 = vrot.slane %v241, %v247
    %v249 = vlaneseq
    %v250 = vshrl.u32 %v249, 7
    %v251 = vsub.s32 1, %v250
    %v252 = vrot.slane %v241, %v251
    %v255 = vmul.f32 %v248, %v48
    %v256 = vmul.f32 %v252, %v49
    %v258 = vlaneseq
    %v259 = vshrl.u32 %v258, 7
    %v260 = vsub.s32 0, %v259
    %v261 = vrot.slane %v243, %v260
    %v262 = vlaneseq
    %v263 = vshrl.u32 %v262, 7
    %v264 = vsub.s32 1, %v263
    %v265 = vrot.slane %v243, %v264
    %v268 = vmul.f32 %v261, %v65
    %v269 = vmul.f32 %v265, %v66
    %v270 = vsub.f32 %v255, %v268
    %v271 = vsub.f32 %v256, %v269
    %v272 = vadd.f32 %v230, %v270
    %v273 = vadd.f32 %v231, %v271
    %v274 = vmul.f32 %v248, %v65
    %v275 = vmul.f32 %v252, %v66
    %v276 = vmul.f32 %v261, %v48
    %v277 = vmul.f32 %v265, %v49
    %v278 = vadd.f32 %v274, %v276
    %v279 = vadd.f32 %v275, %v277
    %v280 = vadd.f32 %v238, %v278
    %v281 = vadd.f32 %v239, %v279
    %s282 = scalar_lea.vmem [#allocation2], 5
    %v283 = vld [vmem:[%s282] ss:$8 sm:$0x3]
    %s284 = scalar_lea.vmem %s74, 5 [#allocation2]
    %v285 = vld [vmem:[%s284] ss:$8 sm:$0x3]
    %v287 = vlaneseq
    %v288 = vshrl.u32 %v287, 7
    %v289 = vsub.s32 0, %v288
    %v290 = vrot.slane %v283, %v289
    %v291 = vlaneseq
    %v292 = vshrl.u32 %v291, 7
    %v293 = vsub.s32 1, %v292
    %v294 = vrot.slane %v283, %v293
    %v297 = vmul.f32 %v290, %v50
    %v298 = vmul.f32 %v294, %v51
    %v300 = vlaneseq
    %v301 = vshrl.u32 %v300, 7
    %v302 = vsub.s32 0, %v301
    %v303 = vrot.slane %v285, %v302
    %v304 = vlaneseq
    %v305 = vshrl.u32 %v304, 7
    %v306 = vsub.s32 1, %v305
    %v307 = vrot.slane %v285, %v306
    %v310 = vmul.f32 %v303, %v67
    %v311 = vmul.f32 %v307, %v68
    %v312 = vsub.f32 %v297, %v310
    %v313 = vsub.f32 %v298, %v311
    %v314 = vadd.f32 %v272, %v312
    %v315 = vadd.f32 %v273, %v313
    %v316 = vmul.f32 %v290, %v67
    %v317 = vmul.f32 %v294, %v68
    %v318 = vmul.f32 %v303, %v50
    %v319 = vmul.f32 %v307, %v51
    %v320 = vadd.f32 %v316, %v318
    %v321 = vadd.f32 %v317, %v319
    %v322 = vadd.f32 %v280, %v320
    %v323 = vadd.f32 %v281, %v321
    %s324 = scalar_lea.vmem [#allocation2], 6
    %v325 = vld [vmem:[%s324] ss:$8 sm:$0x3]
    %s326 = scalar_lea.vmem %s74, 6 [#allocation2]
    %v327 = vld [vmem:[%s326] ss:$8 sm:$0x3]
    %v329 = vlaneseq
    %v330 = vshrl.u32 %v329, 7
    %v331 = vsub.s32 0, %v330
    %v332 = vrot.slane %v325, %v331
    %v333 = vlaneseq
    %v334 = vshrl.u32 %v333, 7
    %v335 = vsub.s32 1, %v334
    %v336 = vrot.slane %v325, %v335
    %v339 = vmul.f32 %v332, %v52
    %v340 = vmul.f32 %v336, %v53
    %v342 = vlaneseq
    %v343 = vshrl.u32 %v342, 7
    %v344 = vsub.s32 0, %v343
    %v345 = vrot.slane %v327, %v344
    %v346 = vlaneseq
    %v347 = vshrl.u32 %v346, 7
    %v348 = vsub.s32 1, %v347
    %v349 = vrot.slane %v327, %v348
    %v352 = vmul.f32 %v345, %v69
    %v353 = vmul.f32 %v349, %v70
    %v354 = vsub.f32 %v339, %v352
    %v355 = vsub.f32 %v340, %v353
    %v356 = vadd.f32 %v314, %v354
    %v357 = vadd.f32 %v315, %v355
    %v358 = vmul.f32 %v332, %v69
    %v359 = vmul.f32 %v336, %v70
    %v360 = vmul.f32 %v345, %v52
    %v361 = vmul.f32 %v349, %v53
    %v362 = vadd.f32 %v358, %v360
    %v363 = vadd.f32 %v359, %v361
    %v364 = vadd.f32 %v322, %v362
    %v365 = vadd.f32 %v323, %v363
    %s366 = scalar_lea.vmem [#allocation2], 7
    %v367 = vld [vmem:[%s366] ss:$8 sm:$0x3]
    %s368 = scalar_lea.vmem %s74, 7 [#allocation2]
    %v369 = vld [vmem:[%s368] ss:$8 sm:$0x3]
    %v371 = vlaneseq
    %v372 = vshrl.u32 %v371, 7
    %v373 = vsub.s32 0, %v372
    %v374 = vrot.slane %v367, %v373
    %v375 = vlaneseq
    %v376 = vshrl.u32 %v375, 7
    %v377 = vsub.s32 1, %v376
    %v378 = vrot.slane %v367, %v377
    %v381 = vmul.f32 %v374, %v54
    %v382 = vmul.f32 %v378, %v55
    %v384 = vlaneseq
    %v385 = vshrl.u32 %v384, 7
    %v386 = vsub.s32 0, %v385
    %v387 = vrot.slane %v369, %v386
    %v388 = vlaneseq
    %v389 = vshrl.u32 %v388, 7
    %v390 = vsub.s32 1, %v389
    %v391 = vrot.slane %v369, %v390
    %v394 = vmul.f32 %v387, %v71
    %v395 = vmul.f32 %v391, %v72
    %v396 = vsub.f32 %v381, %v394
    %v397 = vsub.f32 %v382, %v395
    %v398 = vadd.f32 %v356, %v396
    %v399 = vadd.f32 %v357, %v397
    %v400 = vmul.f32 %v374, %v71
    %v401 = vmul.f32 %v378, %v72
    %v402 = vmul.f32 %v387, %v54
    %v403 = vmul.f32 %v391, %v55
    %v404 = vadd.f32 %v400, %v402
    %v405 = vadd.f32 %v401, %v403
    %v406 = vadd.f32 %v364, %v404
    %v407 = vadd.f32 %v365, %v405
    %408 = vst [vmem:[#allocation7] sm:$0xff] %v398
    %409 = vst [vmem:[#allocation7 + $0x8] sm:$0xff] %v399
    %s410 = scalar_lea.vmem [#allocation7], 32
    %411 = vst [vmem:[%s410] sm:$0xff] %v406
    %412 = vst [vmem:[%s410 + $0x8] sm:$0xff] %v407
    %s413 = scalar_lea.vmem [#allocation2], 16
    %v414 = vld [vmem:[%s413] ss:$8 sm:$0x3]
    %s415 = scalar_lea.vmem [#allocation2], 48
    %v416 = vld [vmem:[%s415] ss:$8 sm:$0x3]
    %v418 = vlaneseq
    %v419 = vshrl.u32 %v418, 7
    %v420 = vsub.s32 0, %v419
    %v421 = vrot.slane %v414, %v420
    %v422 = vlaneseq
    %v423 = vshrl.u32 %v422, 7
    %v424 = vsub.s32 1, %v423
    %v425 = vrot.slane %v414, %v424
    %v428 = vmul.f32 %v421, %v40
    %v429 = vmul.f32 %v425, %v41
    %v431 = vlaneseq
    %v432 = vshrl.u32 %v431, 7
    %v433 = vsub.s32 0, %v432
    %v434 = vrot.slane %v416, %v433
    %v435 = vlaneseq
    %v436 = vshrl.u32 %v435, 7
    %v437 = vsub.s32 1, %v436
    %v438 = vrot.slane %v416, %v437
    %v441 = vmul.f32 %v434, %v57
    %v442 = vmul.f32 %v438, %v58
    %v443 = vsub.f32 %v428, %v441
    %v444 = vsub.f32 %v429, %v442
    %v445 = vadd.f32 %v443, 0.0
    %v446 = vadd.f32 %v444, 0.0
    %v447 = vmul.f32 %v421, %v57
    %v448 = vmul.f32 %v425, %v58
    %v449 = vmul.f32 %v434, %v40
    %v450 = vmul.f32 %v438, %v41
    %v451 = vadd.f32 %v447, %v449
    %v452 = vadd.f32 %v448, %v450
    %v453 = vadd.f32 %v451, 0.0
    %v454 = vadd.f32 %v452, 0.0
    %s455 = scalar_lea.vmem %s413, 1 [#allocation2]
    %v456 = vld [vmem:[%s455] ss:$8 sm:$0x3]
    %s457 = scalar_lea.vmem %s415, 1 [#allocation2]
    %v458 = vld [vmem:[%s457] ss:$8 sm:$0x3]
    %v460 = vlaneseq
    %v461 = vshrl.u32 %v460, 7
    %v462 = vsub.s32 0, %v461
    %v463 = vrot.slane %v456, %v462
    %v464 = vlaneseq
    %v465 = vshrl.u32 %v464, 7
    %v466 = vsub.s32 1, %v465
    %v467 = vrot.slane %v456, %v466
    %v470 = vmul.f32 %v463, %v42
    %v471 = vmul.f32 %v467, %v43
    %v473 = vlaneseq
    %v474 = vshrl.u32 %v473, 7
    %v475 = vsub.s32 0, %v474
    %v476 = vrot.slane %v458, %v475
    %v477 = vlaneseq
    %v478 = vshrl.u32 %v477, 7
    %v479 = vsub.s32 1, %v478
    %v480 = vrot.slane %v458, %v479
    %v483 = vmul.f32 %v476, %v59
    %v484 = vmul.f32 %v480, %v60
    %v485 = vsub.f32 %v470, %v483
    %v486 = vsub.f32 %v471, %v484
    %v487 = vadd.f32 %v445, %v485
    %v488 = vadd.f32 %v446, %v486
    %v489 = vmul.f32 %v463, %v59
    %v490 = vmul.f32 %v467, %v60
    %v491 = vmul.f32 %v476, %v42
    %v492 = vmul.f32 %v480, %v43
    %v493 = vadd.f32 %v489, %v491
    %v494 = vadd.f32 %v490, %v492
    %v495 = vadd.f32 %v453, %v493
    %v496 = vadd.f32 %v454, %v494
    %s497 = scalar_lea.vmem %s413, 2 [#allocation2]
    %v498 = vld [vmem:[%s497] ss:$8 sm:$0x3]
    %s499 = scalar_lea.vmem %s415, 2 [#allocation2]
    %v500 = vld [vmem:[%s499] ss:$8 sm:$0x3]
    %v502 = vlaneseq
    %v503 = vshrl.u32 %v502, 7
    %v504 = vsub.s32 0, %v503
    %v505 = vrot.slane %v498, %v504
    %v506 = vlaneseq
    %v507 = vshrl.u32 %v506, 7
    %v508 = vsub.s32 1, %v507
    %v509 = vrot.slane %v498, %v508
    %v512 = vmul.f32 %v505, %v44
    %v513 = vmul.f32 %v509, %v45
    %v515 = vlaneseq
    %v516 = vshrl.u32 %v515, 7
    %v517 = vsub.s32 0, %v516
    %v518 = vrot.slane %v500, %v517
    %v519 = vlaneseq
    %v520 = vshrl.u32 %v519, 7
    %v521 = vsub.s32 1, %v520
    %v522 = vrot.slane %v500, %v521
    %v525 = vmul.f32 %v518, %v61
    %v526 = vmul.f32 %v522, %v62
    %v527 = vsub.f32 %v512, %v525
    %v528 = vsub.f32 %v513, %v526
    %v529 = vadd.f32 %v487, %v527
    %v530 = vadd.f32 %v488, %v528
    %v531 = vmul.f32 %v505, %v61
    %v532 = vmul.f32 %v509, %v62
    %v533 = vmul.f32 %v518, %v44
    %v534 = vmul.f32 %v522, %v45
    %v535 = vadd.f32 %v531, %v533
    %v536 = vadd.f32 %v532, %v534
    %v537 = vadd.f32 %v495, %v535
    %v538 = vadd.f32 %v496, %v536
    %s539 = scalar_lea.vmem %s413, 3 [#allocation2]
    %v540 = vld [vmem:[%s539] ss:$8 sm:$0x3]
    %s541 = scalar_lea.vmem %s415, 3 [#allocation2]
    %v542 = vld [vmem:[%s541] ss:$8 sm:$0x3]
    %v544 = vlaneseq
    %v545 = vshrl.u32 %v544, 7
    %v546 = vsub.s32 0, %v545
    %v547 = vrot.slane %v540, %v546
    %v548 = vlaneseq
    %v549 = vshrl.u32 %v548, 7
    %v550 = vsub.s32 1, %v549
    %v551 = vrot.slane %v540, %v550
    %v554 = vmul.f32 %v547, %v46
    %v555 = vmul.f32 %v551, %v47
    %v557 = vlaneseq
    %v558 = vshrl.u32 %v557, 7
    %v559 = vsub.s32 0, %v558
    %v560 = vrot.slane %v542, %v559
    %v561 = vlaneseq
    %v562 = vshrl.u32 %v561, 7
    %v563 = vsub.s32 1, %v562
    %v564 = vrot.slane %v542, %v563
    %v567 = vmul.f32 %v560, %v63
    %v568 = vmul.f32 %v564, %v64
    %v569 = vsub.f32 %v554, %v567
    %v570 = vsub.f32 %v555, %v568
    %v571 = vadd.f32 %v529, %v569
    %v572 = vadd.f32 %v530, %v570
    %v573 = vmul.f32 %v547, %v63
    %v574 = vmul.f32 %v551, %v64
    %v575 = vmul.f32 %v560, %v46
    %v576 = vmul.f32 %v564, %v47
    %v577 = vadd.f32 %v573, %v575
    %v578 = vadd.f32 %v574, %v576
    %v579 = vadd.f32 %v537, %v577
    %v580 = vadd.f32 %v538, %v578
    %s581 = scalar_lea.vmem %s413, 4 [#allocation2]
    %v582 = vld [vmem:[%s581] ss:$8 sm:$0x3]
    %s583 = scalar_lea.vmem %s415, 4 [#allocation2]
    %v584 = vld [vmem:[%s583] ss:$8 sm:$0x3]
    %v586 = vlaneseq
    %v587 = vshrl.u32 %v586, 7
    %v588 = vsub.s32 0, %v587
    %v589 = vrot.slane %v582, %v588
    %v590 = vlaneseq
    %v591 = vshrl.u32 %v590, 7
    %v592 = vsub.s32 1, %v591
    %v593 = vrot.slane %v582, %v592
    %v596 = vmul.f32 %v589, %v48
    %v597 = vmul.f32 %v593, %v49
    %v599 = vlaneseq
    %v600 = vshrl.u32 %v599, 7
    %v601 = vsub.s32 0, %v600
    %v602 = vrot.slane %v584, %v601
    %v603 = vlaneseq
    %v604 = vshrl.u32 %v603, 7
    %v605 = vsub.s32 1, %v604
    %v606 = vrot.slane %v584, %v605
    %v609 = vmul.f32 %v602, %v65
    %v610 = vmul.f32 %v606, %v66
    %v611 = vsub.f32 %v596, %v609
    %v612 = vsub.f32 %v597, %v610
    %v613 = vadd.f32 %v571, %v611
    %v614 = vadd.f32 %v572, %v612
    %v615 = vmul.f32 %v589, %v65
    %v616 = vmul.f32 %v593, %v66
    %v617 = vmul.f32 %v602, %v48
    %v618 = vmul.f32 %v606, %v49
    %v619 = vadd.f32 %v615, %v617
    %v620 = vadd.f32 %v616, %v618
    %v621 = vadd.f32 %v579, %v619
    %v622 = vadd.f32 %v580, %v620
    %s623 = scalar_lea.vmem %s413, 5 [#allocation2]
    %v624 = vld [vmem:[%s623] ss:$8 sm:$0x3]
    %s625 = scalar_lea.vmem %s415, 5 [#allocation2]
    %v626 = vld [vmem:[%s625] ss:$8 sm:$0x3]
    %v628 = vlaneseq
    %v629 = vshrl.u32 %v628, 7
    %v630 = vsub.s32 0, %v629
    %v631 = vrot.slane %v624, %v630
    %v632 = vlaneseq
    %v633 = vshrl.u32 %v632, 7
    %v634 = vsub.s32 1, %v633
    %v635 = vrot.slane %v624, %v634
    %v638 = vmul.f32 %v631, %v50
    %v639 = vmul.f32 %v635, %v51
    %v641 = vlaneseq
    %v642 = vshrl.u32 %v641, 7
    %v643 = vsub.s32 0, %v642
    %v644 = vrot.slane %v626, %v643
    %v645 = vlaneseq
    %v646 = vshrl.u32 %v645, 7
    %v647 = vsub.s32 1, %v646
    %v648 = vrot.slane %v626, %v647
    %v651 = vmul.f32 %v644, %v67
    %v652 = vmul.f32 %v648, %v68
    %v653 = vsub.f32 %v638, %v651
    %v654 = vsub.f32 %v639, %v652
    %v655 = vadd.f32 %v613, %v653
    %v656 = vadd.f32 %v614, %v654
    %v657 = vmul.f32 %v631, %v67
    %v658 = vmul.f32 %v635, %v68
    %v659 = vmul.f32 %v644, %v50
    %v660 = vmul.f32 %v648, %v51
    %v661 = vadd.f32 %v657, %v659
    %v662 = vadd.f32 %v658, %v660
    %v663 = vadd.f32 %v621, %v661
    %v664 = vadd.f32 %v622, %v662
    %s665 = scalar_lea.vmem %s413, 6 [#allocation2]
    %v666 = vld [vmem:[%s665] ss:$8 sm:$0x3]
    %s667 = scalar_lea.vmem %s415, 6 [#allocation2]
    %v668 = vld [vmem:[%s667] ss:$8 sm:$0x3]
    %v670 = vlaneseq
    %v671 = vshrl.u32 %v670, 7
    %v672 = vsub.s32 0, %v671
    %v673 = vrot.slane %v666, %v672
    %v674 = vlaneseq
    %v675 = vshrl.u32 %v674, 7
    %v676 = vsub.s32 1, %v675
    %v677 = vrot.slane %v666, %v676
    %v680 = vmul.f32 %v673, %v52
    %v681 = vmul.f32 %v677, %v53
    %v683 = vlaneseq
    %v684 = vshrl.u32 %v683, 7
    %v685 = vsub.s32 0, %v684
    %v686 = vrot.slane %v668, %v685
    %v687 = vlaneseq
    %v688 = vshrl.u32 %v687, 7
    %v689 = vsub.s32 1, %v688
    %v690 = vrot.slane %v668, %v689
    %v693 = vmul.f32 %v686, %v69
    %v694 = vmul.f32 %v690, %v70
    %v695 = vsub.f32 %v680, %v693
    %v696 = vsub.f32 %v681, %v694
    %v697 = vadd.f32 %v655, %v695
    %v698 = vadd.f32 %v656, %v696
    %v699 = vmul.f32 %v673, %v69
    %v700 = vmul.f32 %v677, %v70
    %v701 = vmul.f32 %v686, %v52
    %v702 = vmul.f32 %v690, %v53
    %v703 = vadd.f32 %v699, %v701
    %v704 = vadd.f32 %v700, %v702
    %v705 = vadd.f32 %v663, %v703
    %v706 = vadd.f32 %v664, %v704
    %s707 = scalar_lea.vmem %s413, 7 [#allocation2]
    %v708 = vld [vmem:[%s707] ss:$8 sm:$0x3]
    %s709 = scalar_lea.vmem %s415, 7 [#allocation2]
    %v710 = vld [vmem:[%s709] ss:$8 sm:$0x3]
    %v712 = vlaneseq
    %v713 = vshrl.u32 %v712, 7
    %v714 = vsub.s32 0, %v713
    %v715 = vrot.slane %v708, %v714
    %v716 = vlaneseq
    %v717 = vshrl.u32 %v716, 7
    %v718 = vsub.s32 1, %v717
    %v719 = vrot.slane %v708, %v718
    %v722 = vmul.f32 %v715, %v54
    %v723 = vmul.f32 %v719, %v55
    %v725 = vlaneseq
    %v726 = vshrl.u32 %v725, 7
    %v727 = vsub.s32 0, %v726
    %v728 = vrot.slane %v710, %v727
    %v729 = vlaneseq
    %v730 = vshrl.u32 %v729, 7
    %v731 = vsub.s32 1, %v730
    %v732 = vrot.slane %v710, %v731
    %v735 = vmul.f32 %v728, %v71
    %v736 = vmul.f32 %v732, %v72
    %v737 = vsub.f32 %v722, %v735
    %v738 = vsub.f32 %v723, %v736
    %v739 = vadd.f32 %v697, %v737
    %v740 = vadd.f32 %v698, %v738
    %v741 = vmul.f32 %v715, %v71
    %v742 = vmul.f32 %v719, %v72
    %v743 = vmul.f32 %v728, %v54
    %v744 = vmul.f32 %v732, %v55
    %v745 = vadd.f32 %v741, %v743
    %v746 = vadd.f32 %v742, %v744
    %v747 = vadd.f32 %v705, %v745
    %v748 = vadd.f32 %v706, %v746
    %s749 = scalar_lea.vmem [#allocation7], 16
    %750 = vst [vmem:[%s749] sm:$0xff] %v739
    %751 = vst [vmem:[%s749 + $0x8] sm:$0xff] %v740
    %s752 = scalar_lea.vmem [#allocation7], 48
    %753 = vst [vmem:[%s752] sm:$0xff] %v747
    %754 = vst [vmem:[%s752 + $0x8] sm:$0xff] %v748
    // Predicated region
    $region18: #{tpu_custom_call.1} parent=1 // pred_check
      _
    $region19: #{tpu_custom_call.1} parent=1 // pred_check_branch
      %756 = sbr.rel (0) target = $region21
    $region20: #{tpu_custom_call.1} parent=1 // pred_region
      %s758 = ssub.s32 1024, 1024
      %759 = vsyncadd [#allocation4], %s758
      %s760 = sshll.u32 [#allocation7], 4
      %s761 = int_to_ptr.vmem [resolvable:$true] %s760
      %766 = dma.vmem_to_hbm [thread:$0]  %s761, 1024, %s2, [#allocation4], 256, 256, 16
    $region21: #{tpu_custom_call.1} parent=1 // pred_fallthru
      _
    // Predicated region
    $region22: #{tpu_custom_call.1} parent=1 // pred_check
      _
    $region23: #{tpu_custom_call.1} parent=1 // pred_check_branch
      %768 = sbr.rel (0) target = $region25
    $region24: #{tpu_custom_call.1} parent=1 // pred_region
      %769 = dma.done [#allocation4], 1024
    $region25: #{tpu_custom_call.1} parent=1 // pred_fallthru
      _
    %770 = vsyncpa [#allocation3], 1
    %771 = vsyncpa [#allocation6], 1
    %772 = vsyncpa [#allocation4], 1

</llo_original>
